<compile_context>
chip_gen: v5e
topology: v5e:2x2
jax: 0.10.0
libtpu: 0.0.40
codegen_flags: <defaults>
</compile_context>

<pallas_src>
import jax
import jax.numpy as jnp
from jax.experimental import pallas as pl
from jax.experimental.pallas import tpu as pltpu

# Network dimensions (fixed by the PyTorch module).
D_IN, D_H1, D_H2, D_OUT = 2, 10, 2, 1

# Packed-parameter layout (row-major W[in, out], then bias).
W1_OFF = 0
B1_OFF = W1_OFF + D_IN * D_H1          # 20
W2_OFF = B1_OFF + D_H1                 # 30
B2_OFF = W2_OFF + D_H1 * D_H2          # 50
W3_OFF = B2_OFF + D_H2                 # 52
B3_OFF = W3_OFF + D_H2 * D_OUT         # 54
N_PARAMS = B3_OFF + D_OUT              # 55

SUB = 8            # sublanes per vreg
LANE = 128         # lanes per vreg
TILE = SUB * LANE  # 1024 samples = one full vreg of batch


def mlp_kernel(x_ref, p_ref, o_ref):
    """x_ref: (D_IN, 8, L) VMEM f32; p_ref: (N_PARAMS,) SMEM f32; o_ref: (1, 8, L)."""
    x0 = x_ref[0]                                        # (8, L) slab
    x1 = x_ref[1]                                        # (8, L) slab

    # Fused layer 1 (2->10, tanh) and layer 2 accumulation (10->2):
    # each h1 slab is folded into the two h2 accumulators and then dropped.
    h2_acc = [None] * D_H2
    for o in range(D_H1):
        pre = (p_ref[W1_OFF + 0 * D_H1 + o] * x0
               + p_ref[W1_OFF + 1 * D_H1 + o] * x1
               + p_ref[B1_OFF + o])
        h1_o = jnp.tanh(pre)
        for j in range(D_H2):
            term = p_ref[W2_OFF + o * D_H2 + j] * h1_o
            h2_acc[j] = term if h2_acc[j] is None else h2_acc[j] + term

    # Fused layer 2 bias+tanh and layer 3 (2->1) accumulation.
    logits = None
    for j in range(D_H2):
        h2_j = jnp.tanh(h2_acc[j] + p_ref[B2_OFF + j])
        term = p_ref[W3_OFF + j] * h2_j
        logits = term if logits is None else logits + term
    logits = logits + p_ref[B3_OFF]

    o_ref[0] = jax.nn.sigmoid(logits).astype(o_ref.dtype)


def pack_params(p):
    """Flatten all weights/biases into one (N_PARAMS,) f32 array for SMEM."""
    packed = jnp.concatenate([
        p["w1"].reshape(-1),   # (2,10)  -> idx i*10 + o
        p["b1"].reshape(-1),   # (10,)
        p["w2"].reshape(-1),   # (10,2)  -> idx i*2 + j
        p["b2"].reshape(-1),   # (2,)
        p["w3"].reshape(-1),   # (2,1)   -> idx j
        p["b3"].reshape(-1),   # (1,)
    ]).astype(jnp.float32)
    assert packed.shape == (N_PARAMS,)
    return packed


def _choose_blocking(B, block_b):
    """Returns (padded_batch, samples_per_block); both multiples of the layout unit."""
    if B <= TILE:
        # Tiny batch: one full-extent block (exempt from the (8,128) rule).
        Bp = pl.cdiv(B, SUB) * SUB
        return Bp, Bp
    Bp = pl.cdiv(B, TILE) * TILE
    bb = max(TILE, (min(block_b, Bp) // TILE) * TILE)        # enforce 8*128 multiple
    if bb >= Bp and Bp >= 2 * TILE:
        bb = (Bp // 2 // TILE) * TILE                        # >=2 steps -> both v7x TCs
    Bp = pl.cdiv(Bp, bb) * bb
    return Bp, bb


def mlp_forward(x, params, block_b=64 * 1024):
    """x: (B, 2) float32. Returns (B, 1) float32 (matches the PyTorch MLP)."""
    B = x.shape[0]
    packed = pack_params(params)

    Bp, bb = _choose_blocking(B, block_b)
    L_total = Bp // SUB
    bl = bb // SUB
    grid = (L_total // bl,)

    # Batch on lanes AND sublanes: (B, 2) -> (2, 8, Bp/8); pad only the tail.
    xt = jnp.pad(x.astype(jnp.float32).T, ((0, 0), (0, Bp - B)))
    xt = xt.reshape(D_IN, SUB, L_total)

    out = pl.pallas_call(
        mlp_kernel,
        out_shape=jax.ShapeDtypeStruct((D_OUT, SUB, L_total), jnp.float32),
        grid=grid,
        in_specs=[
            pl.BlockSpec((D_IN, SUB, bl), lambda i: (0, 0, i)),        # x tile
            pl.BlockSpec(memory_space=pltpu.MemorySpace.SMEM),         # packed params
        ],
        out_specs=pl.BlockSpec((D_OUT, SUB, bl), lambda i: (0, 0, i)),
        compiler_params=pltpu.CompilerParams(
            dimension_semantics=("parallel",),   # pipeline + shard across v7x's 2 TCs
            vmem_limit_bytes=48 * 1024 * 1024,   # explicit; <= v7x 64 MiB physical
        ),
    )(xt, packed)

    return out.reshape(D_OUT, Bp)[:, :B].T       # (B, 1)


def init_params(key):
    """Deterministic init mimicking nn.Linear's U(-1/sqrt(fan_in), 1/sqrt(fan_in))."""
    def linear(key, fan_in, fan_out):
        kw, kb = jax.random.split(key)
        bound = 1.0 / jnp.sqrt(fan_in)
        w = jax.random.uniform(kw, (fan_in, fan_out), jnp.float32, -bound, bound)
        b = jax.random.uniform(kb, (fan_out,), jnp.float32, -bound, bound)
        return w, b

    k1, k2, k3 = jax.random.split(key, 3)
    w1, b1 = linear(k1, D_IN, D_H1)
    w2, b2 = linear(k2, D_H1, D_H2)
    w3, b3 = linear(k3, D_H2, D_OUT)
    return {"w1": w1, "b1": b1, "w2": w2, "b2": b2, "w3": w3, "b3": b3}


def mlp_reference(x, p):
    h = jnp.tanh(x @ p["w1"] + p["b1"])
    h = jnp.tanh(h @ p["w2"] + p["b2"])
    return jax.nn.sigmoid(h @ p["w3"] + p["b3"])


if __name__ == "__main__":
    key = jax.random.PRNGKey(0)
    kx1, kx2, kp = jax.random.split(key, 3)
    params = init_params(kp)

    # Small batch: single full-extent block path.
    x_small = jax.random.normal(kx1, (8, D_IN), dtype=jnp.float32)
    out_small = jax.block_until_ready(mlp_forward(x_small, params))
    ref_small = mlp_reference(x_small, params)
    assert out_small.shape == (8, 1)
    assert jnp.allclose(out_small, ref_small, atol=1e-5, rtol=1e-5)

    # Larger batch: exercises sublane+lane fold, tail padding, multi-block grid.
    x_big = jax.random.normal(kx2, (2500, D_IN), dtype=jnp.float32)
    out_big = jax.block_until_ready(mlp_forward(x_big, params))
    ref_big = mlp_reference(x_big, params)
    assert out_big.shape == (2500, 1)
    assert jnp.allclose(out_big, ref_big, atol=1e-5, rtol=1e-5)

    print("KERNEL_OK")
</pallas_src>

<mosaic_0001>
module attributes {stable_mosaic.version = 11 : i64} {
  func.func @mlp_kernel(%arg0: i32, %arg1: memref<2x8x1xf32, #tpu.memory_space<vmem>>, %arg2: memref<55xf32, #tpu.memory_space<smem>>, %arg3: memref<1x8x1xf32, #tpu.memory_space<vmem>>) attributes {dimension_semantics = [#tpu.dimension_semantics<parallel>], iteration_bounds = array<i64: 1>, scalar_prefetch = 0 : i64, scratch_operands = 0 : i64, tpu.core_type = #tpu.core_type<tc>, window_params = [{transform_indices = @transform_0, window_bounds = array<i64: 2, 8, 1>}, {transform_indices = @transform_1, window_bounds = array<i64: 55>}, {transform_indices = @transform_2, window_bounds = array<i64: 1, 8, 1>}]} {
    %c0 = arith.constant 0 : index
    %c0_0 = arith.constant 0 : index
    %c0_1 = arith.constant 0 : index
    %0 = vector.load %arg1[%c0, %c0_0, %c0_1] : memref<2x8x1xf32, #tpu.memory_space<vmem>>, vector<1x8x1xf32>
    %1 = vector.shape_cast %0 : vector<1x8x1xf32> to vector<8x1xf32>
    %c1 = arith.constant 1 : index
    %c0_2 = arith.constant 0 : index
    %c0_3 = arith.constant 0 : index
    %2 = vector.load %arg1[%c1, %c0_2, %c0_3] : memref<2x8x1xf32, #tpu.memory_space<vmem>>, vector<1x8x1xf32>
    %3 = vector.shape_cast %2 : vector<1x8x1xf32> to vector<8x1xf32>
    %c0_4 = arith.constant 0 : index
    %4 = memref.load %arg2[%c0_4] : memref<55xf32, #tpu.memory_space<smem>>
    %5 = vector.broadcast %4 : f32 to vector<8x1xf32>
    %6 = arith.mulf %5, %1 : vector<8x1xf32>
    %c10 = arith.constant 10 : index
    %7 = memref.load %arg2[%c10] : memref<55xf32, #tpu.memory_space<smem>>
    %8 = vector.broadcast %7 : f32 to vector<8x1xf32>
    %9 = arith.mulf %8, %3 : vector<8x1xf32>
    %10 = arith.addf %6, %9 : vector<8x1xf32>
    %c20 = arith.constant 20 : index
    %11 = memref.load %arg2[%c20] : memref<55xf32, #tpu.memory_space<smem>>
    %12 = vector.broadcast %11 : f32 to vector<8x1xf32>
    %13 = arith.addf %10, %12 : vector<8x1xf32>
    %14 = math.tanh %13 : vector<8x1xf32>
    %c30 = arith.constant 30 : index
    %15 = memref.load %arg2[%c30] : memref<55xf32, #tpu.memory_space<smem>>
    %16 = vector.broadcast %15 : f32 to vector<8x1xf32>
    %17 = arith.mulf %16, %14 : vector<8x1xf32>
    %c31 = arith.constant 31 : index
    %18 = memref.load %arg2[%c31] : memref<55xf32, #tpu.memory_space<smem>>
    %19 = vector.broadcast %18 : f32 to vector<8x1xf32>
    %20 = arith.mulf %19, %14 : vector<8x1xf32>
    %c1_5 = arith.constant 1 : index
    %21 = memref.load %arg2[%c1_5] : memref<55xf32, #tpu.memory_space<smem>>
    %22 = vector.broadcast %21 : f32 to vector<8x1xf32>
    %23 = arith.mulf %22, %1 : vector<8x1xf32>
    %c11 = arith.constant 11 : index
    %24 = memref.load %arg2[%c11] : memref<55xf32, #tpu.memory_space<smem>>
    %25 = vector.broadcast %24 : f32 to vector<8x1xf32>
    %26 = arith.mulf %25, %3 : vector<8x1xf32>
    %27 = arith.addf %23, %26 : vector<8x1xf32>
    %c21 = arith.constant 21 : index
    %28 = memref.load %arg2[%c21] : memref<55xf32, #tpu.memory_space<smem>>
    %29 = vector.broadcast %28 : f32 to vector<8x1xf32>
    %30 = arith.addf %27, %29 : vector<8x1xf32>
    %31 = math.tanh %30 : vector<8x1xf32>
    %c32 = arith.constant 32 : index
    %32 = memref.load %arg2[%c32] : memref<55xf32, #tpu.memory_space<smem>>
    %33 = vector.broadcast %32 : f32 to vector<8x1xf32>
    %34 = arith.mulf %33, %31 : vector<8x1xf32>
    %35 = arith.addf %17, %34 : vector<8x1xf32>
    %c33 = arith.constant 33 : index
    %36 = memref.load %arg2[%c33] : memref<55xf32, #tpu.memory_space<smem>>
    %37 = vector.broadcast %36 : f32 to vector<8x1xf32>
    %38 = arith.mulf %37, %31 : vector<8x1xf32>
    %39 = arith.addf %20, %38 : vector<8x1xf32>
    %c2 = arith.constant 2 : index
    %40 = memref.load %arg2[%c2] : memref<55xf32, #tpu.memory_space<smem>>
    %41 = vector.broadcast %40 : f32 to vector<8x1xf32>
    %42 = arith.mulf %41, %1 : vector<8x1xf32>
    %c12 = arith.constant 12 : index
    %43 = memref.load %arg2[%c12] : memref<55xf32, #tpu.memory_space<smem>>
    %44 = vector.broadcast %43 : f32 to vector<8x1xf32>
    %45 = arith.mulf %44, %3 : vector<8x1xf32>
    %46 = arith.addf %42, %45 : vector<8x1xf32>
    %c22 = arith.constant 22 : index
    %47 = memref.load %arg2[%c22] : memref<55xf32, #tpu.memory_space<smem>>
    %48 = vector.broadcast %47 : f32 to vector<8x1xf32>
    %49 = arith.addf %46, %48 : vector<8x1xf32>
    %50 = math.tanh %49 : vector<8x1xf32>
    %c34 = arith.constant 34 : index
    %51 = memref.load %arg2[%c34] : memref<55xf32, #tpu.memory_space<smem>>
    %52 = vector.broadcast %51 : f32 to vector<8x1xf32>
    %53 = arith.mulf %52, %50 : vector<8x1xf32>
    %54 = arith.addf %35, %53 : vector<8x1xf32>
    %c35 = arith.constant 35 : index
    %55 = memref.load %arg2[%c35] : memref<55xf32, #tpu.memory_space<smem>>
    %56 = vector.broadcast %55 : f32 to vector<8x1xf32>
    %57 = arith.mulf %56, %50 : vector<8x1xf32>
    %58 = arith.addf %39, %57 : vector<8x1xf32>
    %c3 = arith.constant 3 : index
    %59 = memref.load %arg2[%c3] : memref<55xf32, #tpu.memory_space<smem>>
    %60 = vector.broadcast %59 : f32 to vector<8x1xf32>
    %61 = arith.mulf %60, %1 : vector<8x1xf32>
    %c13 = arith.constant 13 : index
    %62 = memref.load %arg2[%c13] : memref<55xf32, #tpu.memory_space<smem>>
    %63 = vector.broadcast %62 : f32 to vector<8x1xf32>
    %64 = arith.mulf %63, %3 : vector<8x1xf32>
    %65 = arith.addf %61, %64 : vector<8x1xf32>
    %c23 = arith.constant 23 : index
    %66 = memref.load %arg2[%c23] : memref<55xf32, #tpu.memory_space<smem>>
    %67 = vector.broadcast %66 : f32 to vector<8x1xf32>
    %68 = arith.addf %65, %67 : vector<8x1xf32>
    %69 = math.tanh %68 : vector<8x1xf32>
    %c36 = arith.constant 36 : index
    %70 = memref.load %arg2[%c36] : memref<55xf32, #tpu.memory_space<smem>>
    %71 = vector.broadcast %70 : f32 to vector<8x1xf32>
    %72 = arith.mulf %71, %69 : vector<8x1xf32>
    %73 = arith.addf %54, %72 : vector<8x1xf32>
    %c37 = arith.constant 37 : index
    %74 = memref.load %arg2[%c37] : memref<55xf32, #tpu.memory_space<smem>>
    %75 = vector.broadcast %74 : f32 to vector<8x1xf32>
    %76 = arith.mulf %75, %69 : vector<8x1xf32>
    %77 = arith.addf %58, %76 : vector<8x1xf32>
    %c4 = arith.constant 4 : index
    %78 = memref.load %arg2[%c4] : memref<55xf32, #tpu.memory_space<smem>>
    %79 = vector.broadcast %78 : f32 to vector<8x1xf32>
    %80 = arith.mulf %79, %1 : vector<8x1xf32>
    %c14 = arith.constant 14 : index
    %81 = memref.load %arg2[%c14] : memref<55xf32, #tpu.memory_space<smem>>
    %82 = vector.broadcast %81 : f32 to vector<8x1xf32>
    %83 = arith.mulf %82, %3 : vector<8x1xf32>
    %84 = arith.addf %80, %83 : vector<8x1xf32>
    %c24 = arith.constant 24 : index
    %85 = memref.load %arg2[%c24] : memref<55xf32, #tpu.memory_space<smem>>
    %86 = vector.broadcast %85 : f32 to vector<8x1xf32>
    %87 = arith.addf %84, %86 : vector<8x1xf32>
    %88 = math.tanh %87 : vector<8x1xf32>
    %c38 = arith.constant 38 : index
    %89 = memref.load %arg2[%c38] : memref<55xf32, #tpu.memory_space<smem>>
    %90 = vector.broadcast %89 : f32 to vector<8x1xf32>
    %91 = arith.mulf %90, %88 : vector<8x1xf32>
    %92 = arith.addf %73, %91 : vector<8x1xf32>
    %c39 = arith.constant 39 : index
    %93 = memref.load %arg2[%c39] : memref<55xf32, #tpu.memory_space<smem>>
    %94 = vector.broadcast %93 : f32 to vector<8x1xf32>
    %95 = arith.mulf %94, %88 : vector<8x1xf32>
    %96 = arith.addf %77, %95 : vector<8x1xf32>
    %c5 = arith.constant 5 : index
    %97 = memref.load %arg2[%c5] : memref<55xf32, #tpu.memory_space<smem>>
    %98 = vector.broadcast %97 : f32 to vector<8x1xf32>
    %99 = arith.mulf %98, %1 : vector<8x1xf32>
    %c15 = arith.constant 15 : index
    %100 = memref.load %arg2[%c15] : memref<55xf32, #tpu.memory_space<smem>>
    %101 = vector.broadcast %100 : f32 to vector<8x1xf32>
    %102 = arith.mulf %101, %3 : vector<8x1xf32>
    %103 = arith.addf %99, %102 : vector<8x1xf32>
    %c25 = arith.constant 25 : index
    %104 = memref.load %arg2[%c25] : memref<55xf32, #tpu.memory_space<smem>>
    %105 = vector.broadcast %104 : f32 to vector<8x1xf32>
    %106 = arith.addf %103, %105 : vector<8x1xf32>
    %107 = math.tanh %106 : vector<8x1xf32>
    %c40 = arith.constant 40 : index
    %108 = memref.load %arg2[%c40] : memref<55xf32, #tpu.memory_space<smem>>
    %109 = vector.broadcast %108 : f32 to vector<8x1xf32>
    %110 = arith.mulf %109, %107 : vector<8x1xf32>
    %111 = arith.addf %92, %110 : vector<8x1xf32>
    %c41 = arith.constant 41 : index
    %112 = memref.load %arg2[%c41] : memref<55xf32, #tpu.memory_space<smem>>
    %113 = vector.broadcast %112 : f32 to vector<8x1xf32>
    %114 = arith.mulf %113, %107 : vector<8x1xf32>
    %115 = arith.addf %96, %114 : vector<8x1xf32>
    %c6 = arith.constant 6 : index
    %116 = memref.load %arg2[%c6] : memref<55xf32, #tpu.memory_space<smem>>
    %117 = vector.broadcast %116 : f32 to vector<8x1xf32>
    %118 = arith.mulf %117, %1 : vector<8x1xf32>
    %c16 = arith.constant 16 : index
    %119 = memref.load %arg2[%c16] : memref<55xf32, #tpu.memory_space<smem>>
    %120 = vector.broadcast %119 : f32 to vector<8x1xf32>
    %121 = arith.mulf %120, %3 : vector<8x1xf32>
    %122 = arith.addf %118, %121 : vector<8x1xf32>
    %c26 = arith.constant 26 : index
    %123 = memref.load %arg2[%c26] : memref<55xf32, #tpu.memory_space<smem>>
    %124 = vector.broadcast %123 : f32 to vector<8x1xf32>
    %125 = arith.addf %122, %124 : vector<8x1xf32>
    %126 = math.tanh %125 : vector<8x1xf32>
    %c42 = arith.constant 42 : index
    %127 = memref.load %arg2[%c42] : memref<55xf32, #tpu.memory_space<smem>>
    %128 = vector.broadcast %127 : f32 to vector<8x1xf32>
    %129 = arith.mulf %128, %126 : vector<8x1xf32>
    %130 = arith.addf %111, %129 : vector<8x1xf32>
    %c43 = arith.constant 43 : index
    %131 = memref.load %arg2[%c43] : memref<55xf32, #tpu.memory_space<smem>>
    %132 = vector.broadcast %131 : f32 to vector<8x1xf32>
    %133 = arith.mulf %132, %126 : vector<8x1xf32>
    %134 = arith.addf %115, %133 : vector<8x1xf32>
    %c7 = arith.constant 7 : index
    %135 = memref.load %arg2[%c7] : memref<55xf32, #tpu.memory_space<smem>>
    %136 = vector.broadcast %135 : f32 to vector<8x1xf32>
    %137 = arith.mulf %136, %1 : vector<8x1xf32>
    %c17 = arith.constant 17 : index
    %138 = memref.load %arg2[%c17] : memref<55xf32, #tpu.memory_space<smem>>
    %139 = vector.broadcast %138 : f32 to vector<8x1xf32>
    %140 = arith.mulf %139, %3 : vector<8x1xf32>
    %141 = arith.addf %137, %140 : vector<8x1xf32>
    %c27 = arith.constant 27 : index
    %142 = memref.load %arg2[%c27] : memref<55xf32, #tpu.memory_space<smem>>
    %143 = vector.broadcast %142 : f32 to vector<8x1xf32>
    %144 = arith.addf %141, %143 : vector<8x1xf32>
    %145 = math.tanh %144 : vector<8x1xf32>
    %c44 = arith.constant 44 : index
    %146 = memref.load %arg2[%c44] : memref<55xf32, #tpu.memory_space<smem>>
    %147 = vector.broadcast %146 : f32 to vector<8x1xf32>
    %148 = arith.mulf %147, %145 : vector<8x1xf32>
    %149 = arith.addf %130, %148 : vector<8x1xf32>
    %c45 = arith.constant 45 : index
    %150 = memref.load %arg2[%c45] : memref<55xf32, #tpu.memory_space<smem>>
    %151 = vector.broadcast %150 : f32 to vector<8x1xf32>
    %152 = arith.mulf %151, %145 : vector<8x1xf32>
    %153 = arith.addf %134, %152 : vector<8x1xf32>
    %c8 = arith.constant 8 : index
    %154 = memref.load %arg2[%c8] : memref<55xf32, #tpu.memory_space<smem>>
    %155 = vector.broadcast %154 : f32 to vector<8x1xf32>
    %156 = arith.mulf %155, %1 : vector<8x1xf32>
    %c18 = arith.constant 18 : index
    %157 = memref.load %arg2[%c18] : memref<55xf32, #tpu.memory_space<smem>>
    %158 = vector.broadcast %157 : f32 to vector<8x1xf32>
    %159 = arith.mulf %158, %3 : vector<8x1xf32>
    %160 = arith.addf %156, %159 : vector<8x1xf32>
    %c28 = arith.constant 28 : index
    %161 = memref.load %arg2[%c28] : memref<55xf32, #tpu.memory_space<smem>>
    %162 = vector.broadcast %161 : f32 to vector<8x1xf32>
    %163 = arith.addf %160, %162 : vector<8x1xf32>
    %164 = math.tanh %163 : vector<8x1xf32>
    %c46 = arith.constant 46 : index
    %165 = memref.load %arg2[%c46] : memref<55xf32, #tpu.memory_space<smem>>
    %166 = vector.broadcast %165 : f32 to vector<8x1xf32>
    %167 = arith.mulf %166, %164 : vector<8x1xf32>
    %168 = arith.addf %149, %167 : vector<8x1xf32>
    %c47 = arith.constant 47 : index
    %169 = memref.load %arg2[%c47] : memref<55xf32, #tpu.memory_space<smem>>
    %170 = vector.broadcast %169 : f32 to vector<8x1xf32>
    %171 = arith.mulf %170, %164 : vector<8x1xf32>
    %172 = arith.addf %153, %171 : vector<8x1xf32>
    %c9 = arith.constant 9 : index
    %173 = memref.load %arg2[%c9] : memref<55xf32, #tpu.memory_space<smem>>
    %174 = vector.broadcast %173 : f32 to vector<8x1xf32>
    %175 = arith.mulf %174, %1 : vector<8x1xf32>
    %c19 = arith.constant 19 : index
    %176 = memref.load %arg2[%c19] : memref<55xf32, #tpu.memory_space<smem>>
    %177 = vector.broadcast %176 : f32 to vector<8x1xf32>
    %178 = arith.mulf %177, %3 : vector<8x1xf32>
    %179 = arith.addf %175, %178 : vector<8x1xf32>
    %c29 = arith.constant 29 : index
    %180 = memref.load %arg2[%c29] : memref<55xf32, #tpu.memory_space<smem>>
    %181 = vector.broadcast %180 : f32 to vector<8x1xf32>
    %182 = arith.addf %179, %181 : vector<8x1xf32>
    %183 = math.tanh %182 : vector<8x1xf32>
    %c48 = arith.constant 48 : index
    %184 = memref.load %arg2[%c48] : memref<55xf32, #tpu.memory_space<smem>>
    %185 = vector.broadcast %184 : f32 to vector<8x1xf32>
    %186 = arith.mulf %185, %183 : vector<8x1xf32>
    %187 = arith.addf %168, %186 : vector<8x1xf32>
    %c49 = arith.constant 49 : index
    %188 = memref.load %arg2[%c49] : memref<55xf32, #tpu.memory_space<smem>>
    %189 = vector.broadcast %188 : f32 to vector<8x1xf32>
    %190 = arith.mulf %189, %183 : vector<8x1xf32>
    %191 = arith.addf %172, %190 : vector<8x1xf32>
    %c50 = arith.constant 50 : index
    %192 = memref.load %arg2[%c50] : memref<55xf32, #tpu.memory_space<smem>>
    %193 = vector.broadcast %192 : f32 to vector<8x1xf32>
    %194 = arith.addf %187, %193 : vector<8x1xf32>
    %195 = math.tanh %194 : vector<8x1xf32>
    %c52 = arith.constant 52 : index
    %196 = memref.load %arg2[%c52] : memref<55xf32, #tpu.memory_space<smem>>
    %197 = vector.broadcast %196 : f32 to vector<8x1xf32>
    %198 = arith.mulf %197, %195 : vector<8x1xf32>
    %c51 = arith.constant 51 : index
    %199 = memref.load %arg2[%c51] : memref<55xf32, #tpu.memory_space<smem>>
    %200 = vector.broadcast %199 : f32 to vector<8x1xf32>
    %201 = arith.addf %191, %200 : vector<8x1xf32>
    %202 = math.tanh %201 : vector<8x1xf32>
    %c53 = arith.constant 53 : index
    %203 = memref.load %arg2[%c53] : memref<55xf32, #tpu.memory_space<smem>>
    %204 = vector.broadcast %203 : f32 to vector<8x1xf32>
    %205 = arith.mulf %204, %202 : vector<8x1xf32>
    %206 = arith.addf %198, %205 : vector<8x1xf32>
    %c54 = arith.constant 54 : index
    %207 = memref.load %arg2[%c54] : memref<55xf32, #tpu.memory_space<smem>>
    %208 = vector.broadcast %207 : f32 to vector<8x1xf32>
    %209 = arith.addf %206, %208 : vector<8x1xf32>
    %210 = arith.negf %209 : vector<8x1xf32>
    %211 = math.exp %210 : vector<8x1xf32>
    %cst = arith.constant 1.000000e+00 : f32
    %212 = vector.broadcast %cst : f32 to vector<8x1xf32>
    %213 = arith.addf %212, %211 : vector<8x1xf32>
    %214 = arith.divf %212, %213 : vector<8x1xf32>
    %c0_6 = arith.constant 0 : index
    %c0_7 = arith.constant 0 : index
    %c0_8 = arith.constant 0 : index
    %215 = vector.load %arg3[%c0_6, %c0_7, %c0_8] : memref<1x8x1xf32, #tpu.memory_space<vmem>>, vector<1x8x1xf32>
    %216 = vector.shape_cast %215 : vector<1x8x1xf32> to vector<8x1xf32>
    %217 = vector.shape_cast %214 : vector<8x1xf32> to vector<1x8x1xf32>
    tpu.vector_store %arg3[%c0_6, %c0_7, %c0_8], %217 {strides = array<i32>} : memref<1x8x1xf32, #tpu.memory_space<vmem>>, vector<1x8x1xf32>,
    return
  }
  func.func @transform_0(%arg0: i32) -> (i32, i32, i32) {
    %c0_i32 = arith.constant 0 : i32
    %c0_i32_0 = arith.constant 0 : i32
    %c0_i32_1 = arith.constant 0 : i32
    return %c0_i32, %c0_i32_0, %arg0 : i32, i32, i32
  }
  func.func @transform_1(%arg0: i32) -> i32 {
    %c0_i32 = arith.constant 0 : i32
    %c0_i32_0 = arith.constant 0 : i32
    return %c0_i32 : i32
  }
  func.func @transform_2(%arg0: i32) -> (i32, i32, i32) {
    %c0_i32 = arith.constant 0 : i32
    %c0_i32_0 = arith.constant 0 : i32
    %c0_i32_1 = arith.constant 0 : i32
    return %c0_i32, %c0_i32_0, %arg0 : i32, i32, i32
  }
}

</mosaic_0001>

<llo_original>
// kernel: tpu_custom_call.1
$region0: #{tpu_custom_call.1}
  #allocation0 [shape = 'u32[]', space=smem, size = 0x4, offset = 0x4, fixed_abs, tag = 'smem constant byte address 0x4 - core index']
  #allocation1 [shape = 'u32[72,128]{1,0:T(1,128)}', space=vmem, size = 0x9000, scoped, tag = 'internal scratch']
  %s0 = inlined_call_operand.vmem [shape: f32[2,8,1], index: 0, kind: input, shape index: {}]
  %s1 = inlined_call_operand.vmem [shape: f32[55], index: 1, kind: input, shape index: {}]
  %s2 = inlined_call_operand.vmem [shape: f32[1,8,1], index: 2, kind: output, shape index: {}]
  %s3 = sld [smem:[#allocation0]]
  $region22: #{tpu_custom_call.1} parent=0
    _
  %s5 = ssub.s32 1, %s3
  %s6 = scalar_select 0, %s5, %s3
  $region1: #{tpu_custom_call.1} parent=0
    #allocation2 [shape = 'u8[512]{0}', space=smem, size = 0x200, scoped, tag = 'input window, operand 1, single buffered']
    #allocation3 [shape = 's32[1]{0}', space=sflag, size = 0x4, scoped, tag = 'scoped memory for tpu_custom_call.1']
    %7 = vsyncpa [#allocation3], 0
    // Predicated region
    $region2: #{tpu_custom_call.1} parent=1 // pred_check
      _
    $region3: #{tpu_custom_call.1} parent=1 // pred_check_branch
      %9 = sbr.rel (0) target = $region5
    $region4: #{tpu_custom_call.1} parent=1 // pred_region
      _
    $region5: #{tpu_custom_call.1} parent=1 // pred_fallthru
      _
    // Predicated region
    $region6: #{tpu_custom_call.1} parent=1 // pred_check
      _
    $region7: #{tpu_custom_call.1} parent=1 // pred_check_branch
      %11 = sbr.rel (0) target = $region9
    $region8: #{tpu_custom_call.1} parent=1 // pred_region
      %13 = vsyncadd [#allocation3], 0
      %s15 = sshll.u32 %s1, 4
      %s16 = int_to_ptr.vmem [resolvable:$true] %s15
      %18 = dma.vmem_to_smem %s16, 16, [#allocation2], [#allocation3]
    $region9: #{tpu_custom_call.1} parent=1 // pred_fallthru
      _
    // Predicated region
    $region10: #{tpu_custom_call.1} parent=1 // pred_check
      _
    $region11: #{tpu_custom_call.1} parent=1 // pred_check_branch
      %20 = sbr.rel (0) target = $region13
    $region12: #{tpu_custom_call.1} parent=1 // pred_region
      %22 = dma.done [#allocation3], 16
    $region13: #{tpu_custom_call.1} parent=1 // pred_fallthru
      _
    %23 = sfence
    %v24 = vld [vmem:[%s0] sm:$0xff]
    %s25 = scalar_lea.vmem %s0, 8
    %v26 = vld [vmem:[%s25] sm:$0xff]
    %s27 = sld [smem:[#allocation2]]
    %v28 = vstv %s27
    %v29 = vmul.f32 %v28, %v24
    %s30 = sld [smem:[#allocation2 + $0xa]]
    %v31 = vstv %s30
    %v32 = vmul.f32 %v31, %v26
    %v33 = vadd.f32 %v29, %v32
    %s34 = sld [smem:[#allocation2 + $0x14]]
    %v35 = vstv %s34
    %v36 = vadd.f32 %v33, %v35
    %v37 = vtanh.pop %v36
    %s38 = sld [smem:[#allocation2 + $0x1e]]
    %v39 = vstv %s38
    %v40 = vmul.f32 %v39, %v37
    %s41 = sld [smem:[#allocation2 + $0x1f]]
    %v42 = vstv %s41
    %v43 = vmul.f32 %v42, %v37
    %s44 = sld [smem:[#allocation2 + $0x1]]
    %v45 = vstv %s44
    %v46 = vmul.f32 %v45, %v24
    %s47 = sld [smem:[#allocation2 + $0xb]]
    %v48 = vstv %s47
    %v49 = vmul.f32 %v48, %v26
    %v50 = vadd.f32 %v46, %v49
    %s51 = sld [smem:[#allocation2 + $0x15]]
    %v52 = vstv %s51
    %v53 = vadd.f32 %v50, %v52
    %v54 = vtanh.pop %v53
    %s55 = sld [smem:[#allocation2 + $0x20]]
    %v56 = vstv %s55
    %v57 = vmul.f32 %v56, %v54
    %v58 = vadd.f32 %v40, %v57
    %s59 = sld [smem:[#allocation2 + $0x21]]
    %v60 = vstv %s59
    %v61 = vmul.f32 %v60, %v54
    %v62 = vadd.f32 %v43, %v61
    %s63 = sld [smem:[#allocation2 + $0x2]]
    %v64 = vstv %s63
    %v65 = vmul.f32 %v64, %v24
    %s66 = sld [smem:[#allocation2 + $0xc]]
    %v67 = vstv %s66
    %v68 = vmul.f32 %v67, %v26
    %v69 = vadd.f32 %v65, %v68
    %s70 = sld [smem:[#allocation2 + $0x16]]
    %v71 = vstv %s70
    %v72 = vadd.f32 %v69, %v71
    %v73 = vtanh.pop %v72
    %s74 = sld [smem:[#allocation2 + $0x22]]
    %v75 = vstv %s74
    %v76 = vmul.f32 %v75, %v73
    %v77 = vadd.f32 %v58, %v76
    %s78 = sld [smem:[#allocation2 + $0x23]]
    %v79 = vstv %s78
    %v80 = vmul.f32 %v79, %v73
    %v81 = vadd.f32 %v62, %v80
    %s82 = sld [smem:[#allocation2 + $0x3]]
    %v83 = vstv %s82
    %v84 = vmul.f32 %v83, %v24
    %s85 = sld [smem:[#allocation2 + $0xd]]
    %v86 = vstv %s85
    %v87 = vmul.f32 %v86, %v26
    %v88 = vadd.f32 %v84, %v87
    %s89 = sld [smem:[#allocation2 + $0x17]]
    %v90 = vstv %s89
    %v91 = vadd.f32 %v88, %v90
    %v92 = vtanh.pop %v91
    %s93 = sld [smem:[#allocation2 + $0x24]]
    %v94 = vstv %s93
    %v95 = vmul.f32 %v94, %v92
    %v96 = vadd.f32 %v77, %v95
    %s97 = sld [smem:[#allocation2 + $0x25]]
    %v98 = vstv %s97
    %v99 = vmul.f32 %v98, %v92
    %v100 = vadd.f32 %v81, %v99
    %s101 = sld [smem:[#allocation2 + $0x4]]
    %v102 = vstv %s101
    %v103 = vmul.f32 %v102, %v24
    %s104 = sld [smem:[#allocation2 + $0xe]]
    %v105 = vstv %s104
    %v106 = vmul.f32 %v105, %v26
    %v107 = vadd.f32 %v103, %v106
    %s108 = sld [smem:[#allocation2 + $0x18]]
    %v109 = vstv %s108
    %v110 = vadd.f32 %v107, %v109
    %v111 = vtanh.pop %v110
    %s112 = sld [smem:[#allocation2 + $0x26]]
    %v113 = vstv %s112
    %v114 = vmul.f32 %v113, %v111
    %v115 = vadd.f32 %v96, %v114
    %s116 = sld [smem:[#allocation2 + $0x27]]
    %v117 = vstv %s116
    %v118 = vmul.f32 %v117, %v111
    %v119 = vadd.f32 %v100, %v118
    %s120 = sld [smem:[#allocation2 + $0x5]]
    %v121 = vstv %s120
    %v122 = vmul.f32 %v121, %v24
    %s123 = sld [smem:[#allocation2 + $0xf]]
    %v124 = vstv %s123
    %v125 = vmul.f32 %v124, %v26
    %v126 = vadd.f32 %v122, %v125
    %s127 = sld [smem:[#allocation2 + $0x19]]
    %v128 = vstv %s127
    %v129 = vadd.f32 %v126, %v128
    %v130 = vtanh.pop %v129
    %s131 = sld [smem:[#allocation2 + $0x28]]
    %v132 = vstv %s131
    %v133 = vmul.f32 %v132, %v130
    %v134 = vadd.f32 %v115, %v133
    %s135 = sld [smem:[#allocation2 + $0x29]]
    %v136 = vstv %s135
    %v137 = vmul.f32 %v136, %v130
    %v138 = vadd.f32 %v119, %v137
    %s139 = sld [smem:[#allocation2 + $0x6]]
    %v140 = vstv %s139
    %v141 = vmul.f32 %v140, %v24
    %s142 = sld [smem:[#allocation2 + $0x10]]
    %v143 = vstv %s142
    %v144 = vmul.f32 %v143, %v26
    %v145 = vadd.f32 %v141, %v144
    %s146 = sld [smem:[#allocation2 + $0x1a]]
    %v147 = vstv %s146
    %v148 = vadd.f32 %v145, %v147
    %v149 = vtanh.pop %v148
    %s150 = sld [smem:[#allocation2 + $0x2a]]
    %v151 = vstv %s150
    %v152 = vmul.f32 %v151, %v149
    %v153 = vadd.f32 %v134, %v152
    %s154 = sld [smem:[#allocation2 + $0x2b]]
    %v155 = vstv %s154
    %v156 = vmul.f32 %v155, %v149
    %v157 = vadd.f32 %v138, %v156
    %s158 = sld [smem:[#allocation2 + $0x7]]
    %v159 = vstv %s158
    %v160 = vmul.f32 %v159, %v24
    %s161 = sld [smem:[#allocation2 + $0x11]]
    %v162 = vstv %s161
    %v163 = vmul.f32 %v162, %v26
    %v164 = vadd.f32 %v160, %v163
    %s165 = sld [smem:[#allocation2 + $0x1b]]
    %v166 = vstv %s165
    %v167 = vadd.f32 %v164, %v166
    %v168 = vtanh.pop %v167
    %s169 = sld [smem:[#allocation2 + $0x2c]]
    %v170 = vstv %s169
    %v171 = vmul.f32 %v170, %v168
    %v172 = vadd.f32 %v153, %v171
    %s173 = sld [smem:[#allocation2 + $0x2d]]
    %v174 = vstv %s173
    %v175 = vmul.f32 %v174, %v168
    %v176 = vadd.f32 %v157, %v175
    %s177 = sld [smem:[#allocation2 + $0x8]]
    %v178 = vstv %s177
    %v179 = vmul.f32 %v178, %v24
    %s180 = sld [smem:[#allocation2 + $0x12]]
    %v181 = vstv %s180
    %v182 = vmul.f32 %v181, %v26
    %v183 = vadd.f32 %v179, %v182
    %s184 = sld [smem:[#allocation2 + $0x1c]]
    %v185 = vstv %s184
    %v186 = vadd.f32 %v183, %v185
    %v187 = vtanh.pop %v186
    %s188 = sld [smem:[#allocation2 + $0x2e]]
    %v189 = vstv %s188
    %v190 = vmul.f32 %v189, %v187
    %v191 = vadd.f32 %v172, %v190
    %s192 = sld [smem:[#allocation2 + $0x2f]]
    %v193 = vstv %s192
    %v194 = vmul.f32 %v193, %v187
    %v195 = vadd.f32 %v176, %v194
    %s196 = sld [smem:[#allocation2 + $0x9]]
    %v197 = vstv %s196
    %v198 = vmul.f32 %v197, %v24
    %s199 = sld [smem:[#allocation2 + $0x13]]
    %v200 = vstv %s199
    %v201 = vmul.f32 %v200, %v26
    %v202 = vadd.f32 %v198, %v201
    %s203 = sld [smem:[#allocation2 + $0x1d]]
    %v204 = vstv %s203
    %v205 = vadd.f32 %v202, %v204
    %v206 = vtanh.pop %v205
    %s207 = sld [smem:[#allocation2 + $0x30]]
    %v208 = vstv %s207
    %v209 = vmul.f32 %v208, %v206
    %v210 = vadd.f32 %v191, %v209
    %s211 = sld [smem:[#allocation2 + $0x31]]
    %v212 = vstv %s211
    %v213 = vmul.f32 %v212, %v206
    %v214 = vadd.f32 %v195, %v213
    %s215 = sld [smem:[#allocation2 + $0x32]]
    %v216 = vstv %s215
    %v217 = vadd.f32 %v210, %v216
    %v218 = vtanh.pop %v217
    %s219 = sld [smem:[#allocation2 + $0x34]]
    %v220 = vstv %s219
    %v221 = vmul.f32 %v220, %v218
    %s222 = sld [smem:[#allocation2 + $0x33]]
    %v223 = vstv %s222
    %v224 = vadd.f32 %v214, %v223
    %v225 = vtanh.pop %v224
    %s226 = sld [smem:[#allocation2 + $0x35]]
    %v227 = vstv %s226
    %v228 = vmul.f32 %v227, %v225
    %v229 = vadd.f32 %v221, %v228
    %s230 = sld [smem:[#allocation2 + $0x36]]
    %v231 = vstv %s230
    %v232 = vadd.f32 %v229, %v231
    %v233 = vxor.u32 %v232, 2147483648
    %v234 = vmul.f32 %v233, 1.442695
    %v235 = vpow.pop %v234
    %v236 = vadd.f32 %v235, 1.0
    %v237 = vrcp.pop %v236
    %v238 = vmul.f32 %v236, %v237
    %v239 = vsub.f32 1.0, %v238
    %v240 = vmul.f32 %v237, %v239
    %v241 = vadd.f32 %v237, %v240
    %vm242 = vweird.f32 %v236
    %vm243 = vweird.f32 %v237
    %vm244 = vmor %vm242, %vm243
    %v245 = vsel %vm244, %v237, %v241
    %v246 = vand.u32 2147483647, %v236
    %vm247 = vcmp.eq.f32.partialorder %v246, 8.507059e+37
    %v248 = vand.u32 %v236, 2147483648
    %v249 = vor.u32 1.1754944e-38, %v248
    %v250 = vsel %vm247, %v249, %v245
    %v251 = vmul.f32 1.0, %v250
    %vm252 = vcmask 7168
    %253 = vst.msk [vmem:[%s2] sm:$0xff] %vm252, %v251
    // Predicated region
    $region14: #{tpu_custom_call.1} parent=1 // pred_check
      _
    $region15: #{tpu_custom_call.1} parent=1 // pred_check_branch
      %255 = sbr.rel (0) target = $region17
    $region16: #{tpu_custom_call.1} parent=1 // pred_region
      _
    $region17: #{tpu_custom_call.1} parent=1 // pred_fallthru
      _
    // Predicated region
    $region18: #{tpu_custom_call.1} parent=1 // pred_check
      _
    $region19: #{tpu_custom_call.1} parent=1 // pred_check_branch
      %257 = sbr.rel (0) target = $region21
    $region20: #{tpu_custom_call.1} parent=1 // pred_region
      _
    $region21: #{tpu_custom_call.1} parent=1 // pred_fallthru
      _
    %258 = vsyncpa [#allocation3], 1

</llo_original>
